<compile_context>
chip_gen: v7x
topology: tpu7x:2x2x1
jax: 0.10.0
libtpu: 0.0.40
codegen_flags: <defaults>
</compile_context>

<pallas_src>
import functools

import jax
import jax.numpy as jnp
from jax.experimental import pallas as pl
from jax.experimental.pallas import tpu as pltpu


def _encoder_kernel(x_ref, w_ref, b_ref, out_ref, acc_ref, *, n_layers):
    # x: (tm, tk)   w: (tk, 2H) packed [w_h | w_c]   b: (1, 2H)
    # out: (n_layers, tm, 2H)   acc: (tm, 2H) f32
    k = pl.program_id(1)

    @pl.when(k == 0)
    def _init():
        acc_ref[...] = jnp.zeros_like(acc_ref)

    acc_ref[...] += jnp.dot(
        x_ref[...], w_ref[...], preferred_element_type=jnp.float32
    )

    @pl.when(k == pl.num_programs(1) - 1)
    def _finalize():
        hc = (acc_ref[...] + b_ref[...]).astype(out_ref.dtype)
        # Fused n_layers "repeat": result already lives on-chip, duplicate the
        # store per layer (cheap vst, no extra HBM read).
        for layer in range(n_layers):
            out_ref[layer] = hc


def pack_encoder_params(w_h, b_h, w_c, b_c):
    """Pack the two Linear layers into one lane-dense weight/bias.

    Do this ONCE at parameter-setup time (not per forward call).
      w_h, w_c: (F, H)   b_h, b_c: (H,)
    Returns W: (F, 2H), b: (1, 2H).
    """
    w_packed = jnp.concatenate([w_h, w_c], axis=1)
    b_packed = jnp.concatenate([b_h, b_c])[None, :]
    return w_packed, b_packed


def _largest_tile(dim, preferred, quantum):
    """Largest t <= preferred with dim % t == 0 and t % quantum == 0.

    Falls back to the full dimension (always legal: a block equal to the full
    array dim is exempt from the (8,128) divisibility rule).
    """
    if dim <= preferred or dim % quantum != 0:
        return dim
    t = (min(preferred, dim) // quantum) * quantum
    while t >= quantum:
        if dim % t == 0:
            return t
        t -= quantum
    return dim


def encoder_forward(image_vectors, w_packed, b_packed, n_layers=2,
                    tm_pref=256, tk_pref=512):
    """Returns (initial_hid, initial_cell), each of shape (n_layers, B, H)."""
    B, F = image_vectors.shape
    F_w, H2 = w_packed.shape
    assert F_w == F and H2 % 2 == 0
    assert b_packed.shape == (1, H2)
    H = H2 // 2

    # Tile the batch (sublane quantum 8) and the contraction dim (lane
    # quantum 128).  2H stays untiled -> full-lane-width output stores.
    tm = _largest_tile(B, tm_pref, 8)
    tk = _largest_tile(F, tk_pref, 128)
    grid = (B // tm, F // tk)

    out = pl.pallas_call(
        functools.partial(_encoder_kernel, n_layers=n_layers),
        out_shape=jax.ShapeDtypeStruct((n_layers, B, H2), image_vectors.dtype),
        grid_spec=pltpu.PrefetchScalarGridSpec(
            num_scalar_prefetch=0,
            grid=grid,
            in_specs=[
                pl.BlockSpec((tm, tk), lambda i, k: (i, k)),       # x
                pl.BlockSpec((tk, H2), lambda i, k: (k, 0)),       # packed W
                pl.BlockSpec((1, H2), lambda i, k: (0, 0)),        # packed b
            ],
            out_specs=pl.BlockSpec((n_layers, tm, H2), lambda i, k: (0, i, 0)),
            scratch_shapes=[pltpu.VMEM((tm, H2), jnp.float32)],
        ),
        compiler_params=pltpu.CompilerParams(
            dimension_semantics=("parallel", "arbitrary"),
        ),
    )(image_vectors, w_packed, b_packed)

    # Split the lane-dense slab back into (h, c).  Cheap XLA slices that
    # downstream consumers typically fuse away.
    initial_hid = out[..., :H]
    initial_cell = out[..., H:]
    return initial_hid, initial_cell


def _ref_forward(image_vectors, w_h, b_h, w_c, b_c, n_layers=2):
    h0 = image_vectors @ w_h + b_h
    c0 = image_vectors @ w_c + b_c
    return (
        jnp.broadcast_to(h0[None], (n_layers,) + h0.shape),
        jnp.broadcast_to(c0[None], (n_layers,) + c0.shape),
    )


if __name__ == "__main__":
    # Small, module-consistent shapes.
    batch = 2
    cnn_feature_dim = 64
    hid_dim = 32
    n_layers = 2

    key = jax.random.PRNGKey(0)
    k_x, k_wh, k_bh, k_wc, k_bc = jax.random.split(key, 5)

    # Deterministic parameter init (PyTorch Linear-style uniform bound).
    bound = 1.0 / (cnn_feature_dim ** 0.5)
    x = jax.random.normal(k_x, (batch, cnn_feature_dim), dtype=jnp.float32)
    w_h = jax.random.uniform(k_wh, (cnn_feature_dim, hid_dim), jnp.float32, -bound, bound)
    b_h = jax.random.uniform(k_bh, (hid_dim,), jnp.float32, -bound, bound)
    w_c = jax.random.uniform(k_wc, (cnn_feature_dim, hid_dim), jnp.float32, -bound, bound)
    b_c = jax.random.uniform(k_bc, (hid_dim,), jnp.float32, -bound, bound)

    # Pack parameters once, outside the forward pass.
    w_packed, b_packed = pack_encoder_params(w_h, b_h, w_c, b_c)

    hid, cell = encoder_forward(x, w_packed, b_packed, n_layers=n_layers)
    hid = jax.block_until_ready(hid)
    cell = jax.block_until_ready(cell)

    ref_hid, ref_cell = _ref_forward(x, w_h, b_h, w_c, b_c, n_layers=n_layers)
    assert hid.shape == (n_layers, batch, hid_dim)
    assert cell.shape == (n_layers, batch, hid_dim)
    assert jnp.allclose(hid, ref_hid, atol=1e-5, rtol=1e-5)
    assert jnp.allclose(cell, ref_cell, atol=1e-5, rtol=1e-5)

    print("KERNEL_OK")
</pallas_src>

<mosaic_0001>
module attributes {stable_mosaic.version = 11 : i64} {
  func.func @_encoder_kernel(%arg0: i32, %arg1: i32, %arg2: memref<2x64xf32, #tpu.memory_space<vmem>>, %arg3: memref<64x64xf32, #tpu.memory_space<vmem>>, %arg4: memref<1x64xf32, #tpu.memory_space<vmem>>, %arg5: memref<2x2x64xf32, #tpu.memory_space<vmem>>, %arg6: memref<2x64xf32, #tpu.memory_space<vmem>>) attributes {dimension_semantics = [#tpu.dimension_semantics<parallel>, #tpu.dimension_semantics<arbitrary>], iteration_bounds = array<i64: 1, 1>, scalar_prefetch = 0 : i64, scratch_operands = 1 : i64, tpu.core_type = #tpu.core_type<tc>, window_params = [{transform_indices = @transform_0, window_bounds = array<i64: 2, 64>}, {transform_indices = @transform_1, window_bounds = array<i64: 64, 64>}, {pipeline_mode = #tpu.pipeline_mode<synchronous>, transform_indices = @transform_2, window_bounds = array<i64: 1, 64>}, {transform_indices = @transform_3, window_bounds = array<i64: 2, 2, 64>}]} {
    %c0_i32 = arith.constant 0 : i32
    %0 = arith.cmpi eq, %arg1, %c0_i32 : i32
    %1 = arith.extui %0 : i1 to i32
    %c0_i32_0 = arith.constant 0 : i32
    %2 = arith.cmpi ne, %1, %c0_i32_0 : i32
    scf.if %2 {
      %cst_10 = arith.constant 0.000000e+00 : f32
      %12 = vector.broadcast %cst_10 : f32 to vector<2x64xf32>
      %c0_11 = arith.constant 0 : index
      %c0_12 = arith.constant 0 : index
      %13 = vector.load %arg6[%c0_11, %c0_12] : memref<2x64xf32, #tpu.memory_space<vmem>>, vector<2x64xf32>
      tpu.vector_store %arg6[%c0_11, %c0_12], %12 {strides = array<i32>} : memref<2x64xf32, #tpu.memory_space<vmem>>, vector<2x64xf32>,
    } else {
    }
    %c0 = arith.constant 0 : index
    %c0_1 = arith.constant 0 : index
    %3 = vector.load %arg6[%c0, %c0_1] : memref<2x64xf32, #tpu.memory_space<vmem>>, vector<2x64xf32>
    %c0_2 = arith.constant 0 : index
    %c0_3 = arith.constant 0 : index
    %4 = vector.load %arg2[%c0_2, %c0_3] : memref<2x64xf32, #tpu.memory_space<vmem>>, vector<2x64xf32>
    %c0_4 = arith.constant 0 : index
    %c0_5 = arith.constant 0 : index
    %5 = vector.load %arg3[%c0_4, %c0_5] : memref<64x64xf32, #tpu.memory_space<vmem>>, vector<64x64xf32>
    %cst = arith.constant dense<0.000000e+00> : vector<2x64xf32>
    %6 = tpu.matmul %4, %5, %cst {dimension_numbers = #tpu.dot_dimension_numbers<[1], [0], [0], [1], [0, 0, 1, 1], [], []>} : vector<2x64xf32>, vector<64x64xf32>, vector<2x64xf32> -> vector<2x64xf32>
    %7 = arith.addf %3, %6 : vector<2x64xf32>
    %c0_6 = arith.constant 0 : index
    %c0_7 = arith.constant 0 : index
    %8 = vector.load %arg6[%c0_6, %c0_7] : memref<2x64xf32, #tpu.memory_space<vmem>>, vector<2x64xf32>
    tpu.vector_store %arg6[%c0_6, %c0_7], %7 {strides = array<i32>} : memref<2x64xf32, #tpu.memory_space<vmem>>, vector<2x64xf32>,
    %c0_i32_8 = arith.constant 0 : i32
    %9 = arith.cmpi eq, %arg1, %c0_i32_8 : i32
    %10 = arith.extui %9 : i1 to i32
    %c0_i32_9 = arith.constant 0 : i32
    %11 = arith.cmpi ne, %10, %c0_i32_9 : i32
    scf.if %11 {
      %c0_10 = arith.constant 0 : index
      %c0_11 = arith.constant 0 : index
      %12 = vector.load %arg6[%c0_10, %c0_11] : memref<2x64xf32, #tpu.memory_space<vmem>>, vector<2x64xf32>
      %c0_12 = arith.constant 0 : index
      %c0_13 = arith.constant 0 : index
      %13 = vector.load %arg4[%c0_12, %c0_13] : memref<1x64xf32, #tpu.memory_space<vmem>>, vector<1x64xf32>
      %14 = vector.broadcast %13 : vector<1x64xf32> to vector<2x64xf32>
      %15 = arith.addf %12, %14 : vector<2x64xf32>
      %c0_14 = arith.constant 0 : index
      %c0_15 = arith.constant 0 : index
      %c0_16 = arith.constant 0 : index
      %16 = vector.load %arg5[%c0_14, %c0_15, %c0_16] : memref<2x2x64xf32, #tpu.memory_space<vmem>>, vector<1x2x64xf32>
      %17 = vector.shape_cast %16 : vector<1x2x64xf32> to vector<2x64xf32>
      %18 = vector.shape_cast %15 : vector<2x64xf32> to vector<1x2x64xf32>
      tpu.vector_store %arg5[%c0_14, %c0_15, %c0_16], %18 {strides = array<i32>} : memref<2x2x64xf32, #tpu.memory_space<vmem>>, vector<1x2x64xf32>,
      %c1 = arith.constant 1 : index
      %c0_17 = arith.constant 0 : index
      %c0_18 = arith.constant 0 : index
      %19 = vector.load %arg5[%c1, %c0_17, %c0_18] : memref<2x2x64xf32, #tpu.memory_space<vmem>>, vector<1x2x64xf32>
      %20 = vector.shape_cast %19 : vector<1x2x64xf32> to vector<2x64xf32>
      %21 = vector.shape_cast %15 : vector<2x64xf32> to vector<1x2x64xf32>
      tpu.vector_store %arg5[%c1, %c0_17, %c0_18], %21 {strides = array<i32>} : memref<2x2x64xf32, #tpu.memory_space<vmem>>, vector<1x2x64xf32>,
    } else {
    }
    return
  }
  func.func @transform_0(%arg0: i32, %arg1: i32) -> (i32, i32) {
    %c0_i32 = arith.constant 0 : i32
    return %arg0, %arg1 : i32, i32
  }
  func.func @transform_1(%arg0: i32, %arg1: i32) -> (i32, i32) {
    %c0_i32 = arith.constant 0 : i32
    %c0_i32_0 = arith.constant 0 : i32
    return %arg1, %c0_i32 : i32, i32
  }
  func.func @transform_2(%arg0: i32, %arg1: i32) -> (i32, i32) {
    %c0_i32 = arith.constant 0 : i32
    %c0_i32_0 = arith.constant 0 : i32
    %c0_i32_1 = arith.constant 0 : i32
    return %c0_i32, %c0_i32_0 : i32, i32
  }
  func.func @transform_3(%arg0: i32, %arg1: i32) -> (i32, i32, i32) {
    %c0_i32 = arith.constant 0 : i32
    %c0_i32_0 = arith.constant 0 : i32
    %c0_i32_1 = arith.constant 0 : i32
    return %c0_i32, %arg0, %c0_i32_0 : i32, i32, i32
  }
}

</mosaic_0001>

<llo_original>
// kernel: tpu_custom_call.1
$region0: #{tpu_custom_call.1}
  #allocation0 [shape = 'u32[]', space=smem, size = 0x4, offset = 0x4, fixed_abs, tag = 'smem constant byte address 0x4 - core index']
  #allocation1 [shape = 'u32[144,128]{1,0:T(1,128)}', space=vmem, size = 0x12000, scoped, tag = 'internal scratch']
  #allocation2 [shape = 'f32[2,64]{1,0:T(2,128)}', space=vmem, size = 0x400, scoped, tag = 'scratch operand']
  %s0 = inlined_call_operand.hbm [shape: f32[2,64], index: 0, kind: input, shape index: {}]
  %s1 = inlined_call_operand.hbm [shape: f32[64,64], index: 1, kind: input, shape index: {}]
  %s2 = inlined_call_operand.vmem [shape: f32[1,64], index: 2, kind: input, shape index: {}]
  %s3 = inlined_call_operand.hbm [shape: f32[2,2,64], index: 3, kind: output, shape index: {}]
  %s4 = sld [smem:[#allocation0]]
  $region38: #{tpu_custom_call.1} parent=0
    _
  %s6 = ssub.s32 1, %s4
  %s7 = scalar_select 0, %s6, %s4
  $region1: #{tpu_custom_call.1} parent=0
    #allocation3 [shape = 'u8[1024]{0}', space=vmem, size = 0x400, scoped, tag = 'input window, operand 0, single buffered']
    #allocation4 [shape = 's32[1]{0}', space=sflag, size = 0x4, scoped, tag = 'scoped memory for tpu_custom_call.1']
    #allocation5 [shape = 's32[1]{0}', space=sflag, size = 0x4, scoped, tag = 'scoped memory for tpu_custom_call.1']
    #allocation6 [shape = 'u8[32768]{0}', space=vmem, size = 0x8000, scoped, tag = 'input window, operand 1, single buffered']
    #allocation7 [shape = 's32[1]{0}', space=sflag, size = 0x4, scoped, tag = 'scoped memory for tpu_custom_call.1']
    #allocation8 [shape = 'u8[2048]{0}', space=vmem, size = 0x800, scoped, tag = 'output window, operand 0, single buffered']
    %8 = vsyncpa [#allocation4], 0
    %9 = vsyncpa [#allocation7], 0
    %10 = vsyncpa [#allocation5], 0
    // Predicated region
    $region2: #{tpu_custom_call.1} parent=1 // pred_check
      _
    $region3: #{tpu_custom_call.1} parent=1 // pred_check_branch
      %12 = sbr.rel (0) target = $region5
    $region4: #{tpu_custom_call.1} parent=1 // pred_region
      %s14 = ssub.s32 32, 32
      %15 = vsyncadd [#allocation4], %s14
      %s17 = sshll.u32 [#allocation3], 4
      %s18 = int_to_ptr.vmem [resolvable:$true] %s17
      %20 = dma.hbm_to_vmem [thread:$0]  %s0, 32, %s18, [#allocation4]
    $region5: #{tpu_custom_call.1} parent=1 // pred_fallthru
      _
    // Predicated region
    $region6: #{tpu_custom_call.1} parent=1 // pred_check
      _
    $region7: #{tpu_custom_call.1} parent=1 // pred_check_branch
      %22 = sbr.rel (0) target = $region9
    $region8: #{tpu_custom_call.1} parent=1 // pred_region
      %s24 = ssub.s32 1024, 1024
      %25 = vsyncadd [#allocation7], %s24
      %s26 = sshll.u32 [#allocation6], 4
      %s27 = int_to_ptr.vmem [resolvable:$true] %s26
      %32 = dma.hbm_to_vmem [thread:$0]  %s1, 1024, %s27, [#allocation7], 128, 128, 8
    $region9: #{tpu_custom_call.1} parent=1 // pred_fallthru
      _
    // Predicated region
    $region10: #{tpu_custom_call.1} parent=1 // pred_check
      _
    $region11: #{tpu_custom_call.1} parent=1 // pred_check_branch
      %34 = sbr.rel (0) target = $region13
    $region12: #{tpu_custom_call.1} parent=1 // pred_region
      _
    $region13: #{tpu_custom_call.1} parent=1 // pred_fallthru
      _
    // Predicated region
    $region14: #{tpu_custom_call.1} parent=1 // pred_check
      _
    $region15: #{tpu_custom_call.1} parent=1 // pred_check_branch
      %36 = sbr.rel (0) target = $region17
    $region16: #{tpu_custom_call.1} parent=1 // pred_region
      %37 = dma.done [#allocation4], 32
    $region17: #{tpu_custom_call.1} parent=1 // pred_fallthru
      _
    // Predicated region
    $region18: #{tpu_custom_call.1} parent=1 // pred_check
      _
    $region19: #{tpu_custom_call.1} parent=1 // pred_check_branch
      %39 = sbr.rel (0) target = $region21
    $region20: #{tpu_custom_call.1} parent=1 // pred_region
      %40 = dma.done [#allocation7], 1024
    $region21: #{tpu_custom_call.1} parent=1 // pred_fallthru
      _
    %p41 = scmp.eq.s32.totalorder 0, 0
    // Predicated region
    $region22: #{tpu_custom_call.1} parent=1 // pred_check
      %p42 = pneg %p41
    $region23: #{tpu_custom_call.1} parent=1 // pred_check_branch
      %44 = sbr.rel (%p42) target = $region25
    $region24: #{tpu_custom_call.1} parent=1 // pred_region
      %vm45 = vcmask 517120
      %46 = vst.msk [vmem:[#allocation2] sm:$0x3] %vm45, 0.0
    $region25: #{tpu_custom_call.1} parent=1 // pred_fallthru
      _
    %v47 = vld [vmem:[#allocation2] sm:$0x3]
    %v48 = vld [vmem:[#allocation3] sm:$0x3]
    %v49 = vld [vmem:[#allocation6] sm:$0xff]
    %v50 = vld [vmem:[#allocation6 + $0x8] sm:$0xff]
    %v51 = vld [vmem:[#allocation6 + $0x10] sm:$0xff]
    %v52 = vld [vmem:[#allocation6 + $0x18] sm:$0xff]
    %v53 = vld [vmem:[#allocation6 + $0x20] sm:$0xff]
    %v54 = vld [vmem:[#allocation6 + $0x28] sm:$0xff]
    %v55 = vld [vmem:[#allocation6 + $0x30] sm:$0xff]
    %v56 = vld [vmem:[#allocation6 + $0x38] sm:$0xff]
    %vm57 = vcmask 523264
    %v59 = vsel %vm57, %v48, 0
    %61 = vmatprep.subr.mxu0 0.0
    %62 = vmatpush1.msra.mxu0 %v49
    %63 = vmatprep.subr.mxu0 0.0
    %64 = vmatpush1.msra.mxu0 %v50
    %65 = vmatprep.subr.mxu0 0.0
    %66 = vmatpush1.msra.mxu0 %v51
    %67 = vmatprep.subr.mxu0 0.0
    %68 = vmatpush1.msra.mxu0 %v52
    %69 = vmatprep.subr.mxu0 0.0
    %70 = vmatpush1.msra.mxu0 %v53
    %71 = vmatprep.subr.mxu0 0.0
    %72 = vmatpush1.msra.mxu0 %v54
    %73 = vmatprep.subr.mxu0 0.0
    %74 = vmatpush1.msra.mxu0 %v55
    %75 = vmatprep.subr.mxu0 0.0
    %76 = vmatpush1.msra.mxu0 %v56
    %77 = vmatprep.subr.mxu0 0.0
    %78 = vmatpush1.msra.mxu0 0.0
    %79 = vmatprep.subr.mxu0 0.0
    %80 = vmatpush1.msra.mxu0 0.0
    %81 = vmatprep.subr.mxu0 0.0
    %82 = vmatpush1.msra.mxu0 0.0
    %83 = vmatprep.subr.mxu0 0.0
    %84 = vmatpush1.msra.mxu0 0.0
    %85 = vmatprep.subr.mxu0 0.0
    %86 = vmatpush1.msra.mxu0 0.0
    %87 = vmatprep.subr.mxu0 0.0
    %88 = vmatpush1.msra.mxu0 0.0
    %89 = vmatprep.subr.mxu0 0.0
    %90 = vmatpush1.msra.mxu0 0.0
    %91 = vmatprep.subr.mxu0 0.0
    %92 = vmatpush1.msra.mxu0 0.0
    %93 = vmatprep.subr.mxu0 0.0
    %94 = vmatpush1.msra.mxu0 0.0
    %95 = vmatprep.subr.mxu0 0.0
    %96 = vmatpush1.msra.mxu0 0.0
    %97 = vmatprep.subr.mxu0 0.0
    %98 = vmatpush1.msra.mxu0 0.0
    %99 = vmatprep.subr.mxu0 0.0
    %100 = vmatpush1.msra.mxu0 0.0
    %101 = vmatprep.subr.mxu0 0.0
    %102 = vmatpush1.msra.mxu0 0.0
    %103 = vmatprep.subr.mxu0 0.0
    %104 = vmatpush1.msra.mxu0 0.0
    %105 = vmatprep.subr.mxu0 0.0
    %106 = vmatpush1.msra.mxu0 0.0
    %107 = vmatprep.subr.mxu0 0.0
    %108 = vmatpush1.msra.mxu0 0.0
    %109 = vmatprep.subr.mxu0 0.0
    %110 = vmatpush1.msra.mxu0 0.0
    %111 = vmatprep.subr.mxu0 0.0
    %112 = vmatpush1.msra.mxu0 0.0
    %113 = vmatprep.subr.mxu0 0.0
    %114 = vmatpush1.msra.mxu0 0.0
    %115 = vmatprep.subr.mxu0 0.0
    %116 = vmatpush1.msra.mxu0 0.0
    %117 = vmatprep.subr.mxu0 0.0
    %118 = vmatpush1.msra.mxu0 0.0
    %119 = vmatprep.subr.mxu0 0.0
    %120 = vmatpush1.msra.mxu0 0.0
    %121 = vmatprep.subr.mxu0 0.0
    %122 = vmatpush1.msra.mxu0 0.0
    %123 = vmatprep.subr.mxu0 0.0
    %124 = vmatpush1.msra.mxu0 0.0
    %125 = vmatprep.mubr.f32.mxu0 0.0
    %126 = vmatmul.mubr.f32.gmra.mrb[0].mxu0 %v59
    %v127 = vpop.f32.mrb[0].mxu0
    %v128 = vadd.f32 0.0, %v127
    %v129 = vpop.f32.mrb[0].mxu0
    %130 = vdwg.mxu0
    %v131 = vadd.f32 %v47, %v128
    %vm132 = vcmask 517120
    %133 = vst.msk [vmem:[#allocation2] sm:$0x3] %vm132, %v131
    // Predicated region
    $region26: #{tpu_custom_call.1} parent=1 // pred_check
      %p134 = pneg %p41
    $region27: #{tpu_custom_call.1} parent=1 // pred_check_branch
      %136 = sbr.rel (%p134) target = $region29
    $region28: #{tpu_custom_call.1} parent=1 // pred_region
      %v137 = vld [vmem:[#allocation2] sm:$0x3]
      %v138 = vld [vmem:[%s2] sm:$0x1]
      %v140 = vlaneseq
      %v141 = vshrl.u32 %v140, 7
      %v142 = vsub.s32 0, %v141
      %v143 = vrot.slane %v138, %v142
      %v145 = vadd.f32 %v137, %v143
      %146 = vst.msk [vmem:[#allocation8] sm:$0x3] %vm132, %v145
      %s147 = scalar_lea.vmem [#allocation8], 2
      %148 = vst.msk [vmem:[%s147] sm:$0x3] %vm132, %v145
    $region29: #{tpu_custom_call.1} parent=1 // pred_fallthru
      _
    // Predicated region
    $region30: #{tpu_custom_call.1} parent=1 // pred_check
      _
    $region31: #{tpu_custom_call.1} parent=1 // pred_check_branch
      %150 = sbr.rel (0) target = $region33
    $region32: #{tpu_custom_call.1} parent=1 // pred_region
      %s152 = ssub.s32 64, 64
      %153 = vsyncadd [#allocation5], %s152
      %s154 = sshll.u32 [#allocation8], 4
      %s155 = int_to_ptr.vmem [resolvable:$true] %s154
      %160 = dma.vmem_to_hbm [thread:$0]  %s155, 64, %s3, [#allocation5], 32, 32, 2
    $region33: #{tpu_custom_call.1} parent=1 // pred_fallthru
      _
    // Predicated region
    $region34: #{tpu_custom_call.1} parent=1 // pred_check
      _
    $region35: #{tpu_custom_call.1} parent=1 // pred_check_branch
      %162 = sbr.rel (0) target = $region37
    $region36: #{tpu_custom_call.1} parent=1 // pred_region
      %163 = dma.done [#allocation5], 64
    $region37: #{tpu_custom_call.1} parent=1 // pred_fallthru
      _
    %164 = vsyncpa [#allocation4], 1
    %165 = vsyncpa [#allocation7], 1
    %166 = vsyncpa [#allocation5], 1

</llo_original>
